<compile_context>
chip_gen: v7x
topology: tpu7x:2x2x1
jax: 0.10.0
libtpu: 0.0.40
codegen_flags: <defaults>
</compile_context>

<pallas_src>
import functools

import jax
import jax.numpy as jnp
from jax import lax
from jax.experimental import pallas as pl
from jax.experimental.pallas import tpu as pltpu

ALMOST_INF = 9999.9   # same-class sentinel, matches the torch reference
_PAD_BIG = 1e30       # excludes zero-padded rows from the negative min
_LANE = 128


def _round_up(x, m):
    return (x + m - 1) // m * m


def _margin_fn(x, m):
    """_apply_margin from the torch reference, with m a compile-time constant."""
    if isinstance(m, (int, float)):
        return jnp.maximum(x + float(m), 0.0)
    if isinstance(m, str) and m.lower() == "soft":
        # numerically stable softplus
        return jnp.maximum(x, 0.0) + jnp.log1p(jnp.exp(-jnp.abs(x)))
    if isinstance(m, str) and m.lower() == "none":
        return x
    raise NotImplementedError(f"margin {m!r} not implemented")


# ----------------------------------------------------------------------------
# Fused cdist + batch-hard kernel
# ----------------------------------------------------------------------------
def _batch_hard_kernel(margin,
                       emb_r_ref, emb_c_ref, sq_r_ref, sq_c_ref,
                       pid_r_ref, pid_c_ref, bias_r_ref,
                       out_ref, fp_acc, fn_acc):
    k = pl.program_id(1)

    @pl.when(k == 0)
    def _():
        fp_acc[...] = jnp.zeros_like(fp_acc)            # distances are >= 0
        fn_acc[...] = jnp.full_like(fn_acc, _PAD_BIG)

    a = emb_r_ref[...]                                  # (TM, D) native dtype
    b = emb_c_ref[...]                                  # (TN, D) native dtype
    # Gram strip on the MXU, f32 accumulation.
    g = lax.dot_general(a, b, (((1,), (1,)), ((), ())),
                        preferred_element_type=jnp.float32)     # (TM, TN)
    d2 = sq_r_ref[...] + sq_c_ref[...] - 2.0 * g
    d = jnp.sqrt(jnp.maximum(d2, 0.0) + 1e-12)          # matches calc_cdist eps

    eq = pid_r_ref[...] == pid_c_ref[...]               # (TM, TN) bool
    d_pos = jnp.where(eq, d, 0.0)
    d_neg = d + jnp.where(eq, ALMOST_INF, 0.0) + bias_r_ref[...]

    fp_acc[...] = jnp.maximum(fp_acc[...], jnp.max(d_pos, axis=0, keepdims=True))
    fn_acc[...] = jnp.minimum(fn_acc[...], jnp.min(d_neg, axis=0, keepdims=True))

    @pl.when(k == pl.num_programs(1) - 1)
    def _():
        out_ref[...] = _margin_fn(fp_acc[...] - fn_acc[...], margin)


def batch_hard_fused(emb, pids, margin=0.1, *, tile=512):
    """Fused batch-hard loss: emb (B, D), pids (B,) -> per-sample loss (B,) f32."""
    B, D = emb.shape
    tn = min(_round_up(tile, _LANE), _round_up(B, _LANE))
    tm = tn
    b_pad = _round_up(B, tn)
    n_col = b_pad // tn
    n_row = b_pad // tm

    # Pad rows to b_pad. Padded rows get pid = -1 (never matches a real pid) so they
    # never act as positives, and a +_PAD_BIG row bias so they never win the min.
    emb_p = jnp.zeros((b_pad, D), emb.dtype).at[:B].set(emb)
    pids_i = pids.astype(jnp.int32)
    pid_r = jnp.full((b_pad, 1), -1, jnp.int32).at[:B, 0].set(pids_i)
    pid_c = jnp.full((1, b_pad), -2, jnp.int32).at[0, :B].set(pids_i)
    sq = jnp.sum(emb_p.astype(jnp.float32) ** 2, axis=1)
    sq_r = sq.reshape(b_pad, 1)
    sq_c = sq.reshape(1, b_pad)
    bias_r = jnp.where(jnp.arange(b_pad) < B, 0.0, _PAD_BIG)
    bias_r = bias_r.astype(jnp.float32).reshape(b_pad, 1)

    ebytes = jnp.dtype(emb_p.dtype).itemsize
    cost = pl.CostEstimate(
        flops=int(2 * b_pad * b_pad * D + 10 * b_pad * b_pad),
        transcendentals=int(b_pad * b_pad),
        bytes_accessed=int(2 * b_pad * D * ebytes * n_col + 20 * b_pad),
    )

    out = pl.pallas_call(
        functools.partial(_batch_hard_kernel, margin),
        out_shape=jax.ShapeDtypeStruct((1, b_pad), jnp.float32),
        grid_spec=pltpu.PrefetchScalarGridSpec(
            num_scalar_prefetch=0,
            grid=(n_col, n_row),                         # reduction (rows) axis last
            in_specs=[
                pl.BlockSpec((tm, D), lambda j, k: (k, 0)),   # emb rows (reduction)
                pl.BlockSpec((tn, D), lambda j, k: (j, 0)),   # emb cols (output)
                pl.BlockSpec((tm, 1), lambda j, k: (k, 0)),   # row norms
                pl.BlockSpec((1, tn), lambda j, k: (0, j)),   # col norms
                pl.BlockSpec((tm, 1), lambda j, k: (k, 0)),   # row pids
                pl.BlockSpec((1, tn), lambda j, k: (0, j)),   # col pids
                pl.BlockSpec((tm, 1), lambda j, k: (k, 0)),   # row pad bias
            ],
            out_specs=pl.BlockSpec((1, tn), lambda j, k: (0, j)),
            scratch_shapes=[pltpu.VMEM((1, tn), jnp.float32),   # running max(pos)
                            pltpu.VMEM((1, tn), jnp.float32)],  # running min(neg)
        ),
        compiler_params=pltpu.CompilerParams(
            dimension_semantics=("parallel", "arbitrary"),
            vmem_limit_bytes=64 * 1024 * 1024,
        ),
        cost_estimate=cost,
    )(emb_p, emb_p, sq_r, sq_c, pid_r, pid_c, bias_r)
    return out[0, :B]


# ----------------------------------------------------------------------------
# Softmax cross-entropy (integer labels), per-sample, mean in the wrapper
# ----------------------------------------------------------------------------
def _ce_kernel(pid_ref, logits_ref, out_ref):
    x = logits_ref[...].astype(jnp.float32)              # (B, C)
    m = jnp.max(x, axis=-1, keepdims=True)
    lse = m + jnp.log(jnp.sum(jnp.exp(x - m), axis=-1, keepdims=True))
    cls = lax.broadcasted_iota(jnp.int32, x.shape, 1)
    tgt = jnp.sum(jnp.where(cls == pid_ref[...], x, 0.0), axis=-1, keepdims=True)
    out_ref[...] = lse - tgt                              # (B, 1) per-sample nll


def cross_entropy_mean(logits, pids):
    B, _ = logits.shape
    per_sample = pl.pallas_call(
        _ce_kernel,
        out_shape=jax.ShapeDtypeStruct((B, 1), jnp.float32),
        in_specs=[pl.BlockSpec(memory_space=pltpu.MemorySpace.VMEM),
                  pl.BlockSpec(memory_space=pltpu.MemorySpace.VMEM)],
        out_specs=pl.BlockSpec(memory_space=pltpu.MemorySpace.VMEM),
    )(pids.astype(jnp.int32).reshape(B, 1), logits)
    return jnp.mean(per_sample)


# ----------------------------------------------------------------------------
# Module-level forward: BatchHardSingleWithSoftmax
# ----------------------------------------------------------------------------
def batch_hard_single_with_softmax(pids, endpoints, margin=0.1):
    bh_total = None
    for trip in endpoints["triplet"]:
        bh = batch_hard_fused(trip, pids, margin)
        bh_total = bh if bh_total is None else bh_total + bh
    ce_total = jnp.float32(0.0)
    for logits in endpoints["soft"]:
        ce_total = ce_total + cross_entropy_mean(logits, pids)
    # TODO(synk): the torch module also prints per-loss means and calls the external
    # log.write('loss', ...); that host-side logging has no Pallas equivalent.
    return bh_total + ce_total


# ----------------------------------------------------------------------------
# Pure-JAX reference mirroring the torch module
# ----------------------------------------------------------------------------
def _ref_forward(pids, endpoints, margin=0.1):
    def cdist(a, b):
        diff = a[:, None, :] - b[None, :, :]
        return jnp.sqrt(jnp.sum(diff * diff, axis=-1) + 1e-12)

    def bh(d, p):
        mask = (p[None, :] == p[:, None]).astype(jnp.float32)
        fp = jnp.max(d * mask, axis=0)
        fn = jnp.min(d + ALMOST_INF * mask, axis=0)
        return jnp.maximum(fp - fn + margin, 0.0)

    def ce(logits, p):
        x = logits.astype(jnp.float32)
        m = jnp.max(x, axis=-1)
        lse = m + jnp.log(jnp.sum(jnp.exp(x - m[:, None]), axis=-1))
        tgt = jnp.take_along_axis(x, p[:, None].astype(jnp.int32), axis=-1)[:, 0]
        return jnp.mean(lse - tgt)

    bh_total = sum(bh(cdist(t.astype(jnp.float32), t.astype(jnp.float32)), pids)
                   for t in endpoints["triplet"])
    ce_total = sum(ce(s, pids) for s in endpoints["soft"])
    return bh_total + ce_total


if __name__ == "__main__":
    B, D, C = 8, 16, 4
    key = jax.random.PRNGKey(0)
    k_pid, k_t0, k_t1, k_s0, k_s1 = jax.random.split(key, 5)

    pids = jax.random.randint(k_pid, (B,), 0, C, dtype=jnp.int32)
    endpoints = {
        "triplet": [jax.random.normal(k_t0, (B, D), jnp.float32),
                    jax.random.normal(k_t1, (B, D), jnp.float32)],
        "soft": [jax.random.normal(k_s0, (B, C), jnp.float32),
                 jax.random.normal(k_s1, (B, C), jnp.float32)],
    }

    out = batch_hard_single_with_softmax(pids, endpoints, margin=0.1)
    out = jax.block_until_ready(out)

    ref = _ref_forward(pids, endpoints, margin=0.1)
    assert out.shape == (B,)
    assert jnp.allclose(out, ref, atol=2e-3, rtol=2e-3), (out, ref)

    print("KERNEL_OK")
</pallas_src>

<mosaic_0001>
module attributes {stable_mosaic.version = 11 : i64} {
  func.func @_batch_hard_kernel(%arg0: i32, %arg1: i32, %arg2: memref<128x16xf32, #tpu.memory_space<vmem>>, %arg3: memref<128x16xf32, #tpu.memory_space<vmem>>, %arg4: memref<128x1xf32, #tpu.memory_space<vmem>>, %arg5: memref<1x128xf32, #tpu.memory_space<vmem>>, %arg6: memref<128x1xi32, #tpu.memory_space<vmem>>, %arg7: memref<1x128xi32, #tpu.memory_space<vmem>>, %arg8: memref<128x1xf32, #tpu.memory_space<vmem>>, %arg9: memref<1x128xf32, #tpu.memory_space<vmem>>, %arg10: memref<1x128xf32, #tpu.memory_space<vmem>>, %arg11: memref<1x128xf32, #tpu.memory_space<vmem>>) attributes {dimension_semantics = [#tpu.dimension_semantics<parallel>, #tpu.dimension_semantics<arbitrary>], iteration_bounds = array<i64: 1, 1>, scalar_prefetch = 0 : i64, scratch_operands = 2 : i64, tpu.core_type = #tpu.core_type<tc>, window_params = [{transform_indices = @transform_0, window_bounds = array<i64: 128, 16>}, {transform_indices = @transform_1, window_bounds = array<i64: 128, 16>}, {transform_indices = @transform_2, window_bounds = array<i64: 128, 1>}, {transform_indices = @transform_3, window_bounds = array<i64: 1, 128>}, {transform_indices = @transform_4, window_bounds = array<i64: 128, 1>}, {transform_indices = @transform_5, window_bounds = array<i64: 1, 128>}, {transform_indices = @transform_6, window_bounds = array<i64: 128, 1>}, {transform_indices = @transform_7, window_bounds = array<i64: 1, 128>}]} {
    %c0_i32 = arith.constant 0 : i32
    %0 = arith.cmpi eq, %arg1, %c0_i32 : i32
    %1 = arith.extui %0 : i1 to i32
    %c0_i32_0 = arith.constant 0 : i32
    %2 = arith.cmpi ne, %1, %c0_i32_0 : i32
    scf.if %2 {
      %cst_32 = arith.constant 0.000000e+00 : f32
      %46 = vector.broadcast %cst_32 : f32 to vector<1x128xf32>
      %c0_33 = arith.constant 0 : index
      %c0_34 = arith.constant 0 : index
      %47 = vector.load %arg10[%c0_33, %c0_34] : memref<1x128xf32, #tpu.memory_space<vmem>>, vector<1x128xf32>
      tpu.vector_store %arg10[%c0_33, %c0_34], %46 {strides = array<i32>} : memref<1x128xf32, #tpu.memory_space<vmem>>, vector<1x128xf32>,
      %cst_35 = arith.constant 1.000000e+30 : f32
      %48 = vector.broadcast %cst_35 : f32 to vector<1x128xf32>
      %c0_36 = arith.constant 0 : index
      %c0_37 = arith.constant 0 : index
      %49 = vector.load %arg11[%c0_36, %c0_37] : memref<1x128xf32, #tpu.memory_space<vmem>>, vector<1x128xf32>
      tpu.vector_store %arg11[%c0_36, %c0_37], %48 {strides = array<i32>} : memref<1x128xf32, #tpu.memory_space<vmem>>, vector<1x128xf32>,
    } else {
    }
    %c0 = arith.constant 0 : index
    %c0_1 = arith.constant 0 : index
    %3 = vector.load %arg2[%c0, %c0_1] : memref<128x16xf32, #tpu.memory_space<vmem>>, vector<128x16xf32>
    %c0_2 = arith.constant 0 : index
    %c0_3 = arith.constant 0 : index
    %4 = vector.load %arg3[%c0_2, %c0_3] : memref<128x16xf32, #tpu.memory_space<vmem>>, vector<128x16xf32>
    %cst = arith.constant dense<0.000000e+00> : vector<128x128xf32>
    %5 = tpu.matmul %3, %4, %cst {dimension_numbers = #tpu.dot_dimension_numbers<[1], [1], [0], [0], [0, 0, 1, 0], [], []>} : vector<128x16xf32>, vector<128x16xf32>, vector<128x128xf32> -> vector<128x128xf32>
    %c0_4 = arith.constant 0 : index
    %c0_5 = arith.constant 0 : index
    %6 = vector.load %arg4[%c0_4, %c0_5] : memref<128x1xf32, #tpu.memory_space<vmem>>, vector<128x1xf32>
    %c0_6 = arith.constant 0 : index
    %c0_7 = arith.constant 0 : index
    %7 = vector.load %arg5[%c0_6, %c0_7] : memref<1x128xf32, #tpu.memory_space<vmem>>, vector<1x128xf32>
    %8 = vector.broadcast %6 : vector<128x1xf32> to vector<128x128xf32>
    %9 = vector.broadcast %7 : vector<1x128xf32> to vector<128x128xf32>
    %10 = arith.addf %8, %9 : vector<128x128xf32>
    %cst_8 = arith.constant 2.000000e+00 : f32
    %11 = vector.broadcast %cst_8 : f32 to vector<128x128xf32>
    %12 = arith.mulf %11, %5 : vector<128x128xf32>
    %13 = arith.subf %10, %12 : vector<128x128xf32>
    %cst_9 = arith.constant 0.000000e+00 : f32
    %14 = vector.broadcast %cst_9 : f32 to vector<128x128xf32>
    %15 = arith.maximumf %13, %14 : vector<128x128xf32>
    %cst_10 = arith.constant 9.99999996E-13 : f32
    %16 = vector.broadcast %cst_10 : f32 to vector<128x128xf32>
    %17 = arith.addf %15, %16 : vector<128x128xf32>
    %18 = math.sqrt %17 : vector<128x128xf32>
    %c0_11 = arith.constant 0 : index
    %c0_12 = arith.constant 0 : index
    %19 = vector.load %arg6[%c0_11, %c0_12] : memref<128x1xi32, #tpu.memory_space<vmem>>, vector<128x1xi32>
    %c0_13 = arith.constant 0 : index
    %c0_14 = arith.constant 0 : index
    %20 = vector.load %arg7[%c0_13, %c0_14] : memref<1x128xi32, #tpu.memory_space<vmem>>, vector<1x128xi32>
    %21 = vector.broadcast %19 : vector<128x1xi32> to vector<128x128xi32>
    %22 = vector.broadcast %20 : vector<1x128xi32> to vector<128x128xi32>
    %23 = arith.cmpi eq, %21, %22 : vector<128x128xi32>
    %cst_15 = arith.constant 0.000000e+00 : f32
    %24 = vector.broadcast %cst_15 : f32 to vector<128x128xf32>
    %25 = arith.select %23, %18, %24 : vector<128x128xi1>, vector<128x128xf32>
    %cst_16 = arith.constant 9.999900e+03 : f32
    %cst_17 = arith.constant 0.000000e+00 : f32
    %26 = vector.broadcast %cst_16 : f32 to vector<128x128xf32>
    %27 = vector.broadcast %cst_17 : f32 to vector<128x128xf32>
    %28 = arith.select %23, %26, %27 : vector<128x128xi1>, vector<128x128xf32>
    %29 = arith.addf %18, %28 : vector<128x128xf32>
    %c0_18 = arith.constant 0 : index
    %c0_19 = arith.constant 0 : index
    %30 = vector.load %arg8[%c0_18, %c0_19] : memref<128x1xf32, #tpu.memory_space<vmem>>, vector<128x1xf32>
    %31 = vector.broadcast %30 : vector<128x1xf32> to vector<128x128xf32>
    %32 = arith.addf %29, %31 : vector<128x128xf32>
    %c0_20 = arith.constant 0 : index
    %c0_21 = arith.constant 0 : index
    %33 = vector.load %arg10[%c0_20, %c0_21] : memref<1x128xf32, #tpu.memory_space<vmem>>, vector<1x128xf32>
    %cst_22 = arith.constant dense<0xFF800000> : vector<128xf32>
    %34 = vector.multi_reduction <maximumf>, %25, %cst_22 [0] : vector<128x128xf32> to vector<128xf32>
    %35 = vector.shape_cast %34 : vector<128xf32> to vector<1x128xf32>
    %36 = arith.maximumf %33, %35 : vector<1x128xf32>
    %c0_23 = arith.constant 0 : index
    %c0_24 = arith.constant 0 : index
    %37 = vector.load %arg10[%c0_23, %c0_24] : memref<1x128xf32, #tpu.memory_space<vmem>>, vector<1x128xf32>
    tpu.vector_store %arg10[%c0_23, %c0_24], %36 {strides = array<i32>} : memref<1x128xf32, #tpu.memory_space<vmem>>, vector<1x128xf32>,
    %c0_25 = arith.constant 0 : index
    %c0_26 = arith.constant 0 : index
    %38 = vector.load %arg11[%c0_25, %c0_26] : memref<1x128xf32, #tpu.memory_space<vmem>>, vector<1x128xf32>
    %cst_27 = arith.constant dense<0x7F800000> : vector<128xf32>
    %39 = vector.multi_reduction <minimumf>, %32, %cst_27 [0] : vector<128x128xf32> to vector<128xf32>
    %40 = vector.shape_cast %39 : vector<128xf32> to vector<1x128xf32>
    %41 = arith.minimumf %38, %40 : vector<1x128xf32>
    %c0_28 = arith.constant 0 : index
    %c0_29 = arith.constant 0 : index
    %42 = vector.load %arg11[%c0_28, %c0_29] : memref<1x128xf32, #tpu.memory_space<vmem>>, vector<1x128xf32>
    tpu.vector_store %arg11[%c0_28, %c0_29], %41 {strides = array<i32>} : memref<1x128xf32, #tpu.memory_space<vmem>>, vector<1x128xf32>,
    %c0_i32_30 = arith.constant 0 : i32
    %43 = arith.cmpi eq, %arg1, %c0_i32_30 : i32
    %44 = arith.extui %43 : i1 to i32
    %c0_i32_31 = arith.constant 0 : i32
    %45 = arith.cmpi ne, %44, %c0_i32_31 : i32
    scf.if %45 {
      %c0_32 = arith.constant 0 : index
      %c0_33 = arith.constant 0 : index
      %46 = vector.load %arg10[%c0_32, %c0_33] : memref<1x128xf32, #tpu.memory_space<vmem>>, vector<1x128xf32>
      %c0_34 = arith.constant 0 : index
      %c0_35 = arith.constant 0 : index
      %47 = vector.load %arg11[%c0_34, %c0_35] : memref<1x128xf32, #tpu.memory_space<vmem>>, vector<1x128xf32>
      %48 = arith.subf %46, %47 : vector<1x128xf32>
      %cst_36 = arith.constant 1.000000e-01 : f32
      %49 = vector.broadcast %cst_36 : f32 to vector<1x128xf32>
      %50 = arith.addf %48, %49 : vector<1x128xf32>
      %cst_37 = arith.constant 0.000000e+00 : f32
      %51 = vector.broadcast %cst_37 : f32 to vector<1x128xf32>
      %52 = arith.maximumf %50, %51 : vector<1x128xf32>
      %c0_38 = arith.constant 0 : index
      %c0_39 = arith.constant 0 : index
      %53 = vector.load %arg9[%c0_38, %c0_39] : memref<1x128xf32, #tpu.memory_space<vmem>>, vector<1x128xf32>
      tpu.vector_store %arg9[%c0_38, %c0_39], %52 {strides = array<i32>} : memref<1x128xf32, #tpu.memory_space<vmem>>, vector<1x128xf32>,
    } else {
    }
    return
  }
  func.func @transform_0(%arg0: i32, %arg1: i32) -> (i32, i32) {
    %c0_i32 = arith.constant 0 : i32
    %c0_i32_0 = arith.constant 0 : i32
    return %arg1, %c0_i32 : i32, i32
  }
  func.func @transform_1(%arg0: i32, %arg1: i32) -> (i32, i32) {
    %c0_i32 = arith.constant 0 : i32
    %c0_i32_0 = arith.constant 0 : i32
    return %arg0, %c0_i32 : i32, i32
  }
  func.func @transform_2(%arg0: i32, %arg1: i32) -> (i32, i32) {
    %c0_i32 = arith.constant 0 : i32
    %c0_i32_0 = arith.constant 0 : i32
    return %arg1, %c0_i32 : i32, i32
  }
  func.func @transform_3(%arg0: i32, %arg1: i32) -> (i32, i32) {
    %c0_i32 = arith.constant 0 : i32
    %c0_i32_0 = arith.constant 0 : i32
    return %c0_i32, %arg0 : i32, i32
  }
  func.func @transform_4(%arg0: i32, %arg1: i32) -> (i32, i32) {
    %c0_i32 = arith.constant 0 : i32
    %c0_i32_0 = arith.constant 0 : i32
    return %arg1, %c0_i32 : i32, i32
  }
  func.func @transform_5(%arg0: i32, %arg1: i32) -> (i32, i32) {
    %c0_i32 = arith.constant 0 : i32
    %c0_i32_0 = arith.constant 0 : i32
    return %c0_i32, %arg0 : i32, i32
  }
  func.func @transform_6(%arg0: i32, %arg1: i32) -> (i32, i32) {
    %c0_i32 = arith.constant 0 : i32
    %c0_i32_0 = arith.constant 0 : i32
    return %arg1, %c0_i32 : i32, i32
  }
  func.func @transform_7(%arg0: i32, %arg1: i32) -> (i32, i32) {
    %c0_i32 = arith.constant 0 : i32
    %c0_i32_0 = arith.constant 0 : i32
    return %c0_i32, %arg0 : i32, i32
  }
}

</mosaic_0001>

<llo_original>
// kernel: tpu_custom_call.1
$region0: #{tpu_custom_call.1}
  #allocation0 [shape = 'u32[]', space=smem, size = 0x4, offset = 0x4, fixed_abs, tag = 'smem constant byte address 0x4 - core index']
  #allocation1 [shape = 'u32[144,128]{1,0:T(1,128)}', space=vmem, size = 0x12000, scoped, tag = 'internal scratch']
  #allocation2 [shape = 'f32[1,128]{1,0:T(1,128)}', space=vmem, size = 0x200, scoped, tag = 'scratch operand']
  #allocation3 [shape = 'f32[1,128]{1,0:T(1,128)}', space=vmem, size = 0x200, scoped, tag = 'scratch operand']
  %s0 = inlined_call_operand.hbm [shape: f32[128,16], index: 0, kind: input, shape index: {}]
  %s1 = inlined_call_operand.hbm [shape: f32[128,16], index: 1, kind: input, shape index: {}]
  %s2 = inlined_call_operand.hbm [shape: f32[128,1], index: 2, kind: input, shape index: {}]
  %s3 = inlined_call_operand.hbm [shape: f32[1,128], index: 3, kind: input, shape index: {}]
  %s4 = inlined_call_operand.hbm [shape: s32[128,1], index: 4, kind: input, shape index: {}]
  %s5 = inlined_call_operand.hbm [shape: s32[1,128], index: 5, kind: input, shape index: {}]
  %s6 = inlined_call_operand.hbm [shape: f32[128,1], index: 6, kind: input, shape index: {}]
  %s7 = inlined_call_operand.hbm [shape: f32[1,128], index: 7, kind: output, shape index: {}]
  %s8 = sld [smem:[#allocation0]]
  $region74: #{tpu_custom_call.1} parent=0
    _
  %s10 = ssub.s32 1, %s8
  %s11 = scalar_select 0, %s10, %s8
  $region1: #{tpu_custom_call.1} parent=0
    #allocation4 [shape = 'u8[65536]{0}', space=vmem, size = 0x10000, scoped, tag = 'input window, operand 0, single buffered']
    #allocation5 [shape = 's32[1]{0}', space=sflag, size = 0x4, scoped, tag = 'scoped memory for tpu_custom_call.1']
    #allocation6 [shape = 's32[1]{0}', space=sflag, size = 0x4, scoped, tag = 'scoped memory for tpu_custom_call.1']
    #allocation7 [shape = 'u8[65536]{0}', space=vmem, size = 0x10000, scoped, tag = 'input window, operand 1, single buffered']
    #allocation8 [shape = 's32[1]{0}', space=sflag, size = 0x4, scoped, tag = 'scoped memory for tpu_custom_call.1']
    #allocation9 [shape = 'u8[65536]{0}', space=vmem, size = 0x10000, scoped, tag = 'input window, operand 2, single buffered']
    #allocation10 [shape = 'u8[512]{0}', space=vmem, size = 0x400, scoped, tag = 'input window, operand 3, single buffered']
    #allocation11 [shape = 's32[1]{0}', space=sflag, size = 0x4, scoped, tag = 'scoped memory for tpu_custom_call.1']
    #allocation12 [shape = 'u8[65536]{0}', space=vmem, size = 0x10000, scoped, tag = 'input window, operand 4, single buffered']
    #allocation13 [shape = 'u8[512]{0}', space=vmem, size = 0x400, scoped, tag = 'input window, operand 5, single buffered']
    #allocation14 [shape = 's32[1]{0}', space=sflag, size = 0x4, scoped, tag = 'scoped memory for tpu_custom_call.1']
    #allocation15 [shape = 'u8[65536]{0}', space=vmem, size = 0x10000, scoped, tag = 'input window, operand 6, single buffered']
    #allocation16 [shape = 'u8[512]{0}', space=vmem, size = 0x400, scoped, tag = 'output window, operand 0, single buffered']
    %12 = vsyncpa [#allocation5], 0
    %13 = vsyncpa [#allocation8], 0
    %14 = vsyncpa [#allocation11], 0
    %15 = vsyncpa [#allocation14], 0
    %16 = vsyncpa [#allocation6], 0
    // Predicated region
    $region2: #{tpu_custom_call.1} parent=1 // pred_check
      _
    $region3: #{tpu_custom_call.1} parent=1 // pred_check_branch
      %18 = sbr.rel (0) target = $region5
    $region4: #{tpu_custom_call.1} parent=1 // pred_region
      %s20 = ssub.s32 2048, 2048
      %21 = vsyncadd [#allocation5], %s20
      %s22 = sshll.u32 [#allocation4], 4
      %s23 = int_to_ptr.vmem [resolvable:$true] %s22
      %28 = dma.hbm_to_vmem [thread:$0]  %s0, 2048, %s23, [#allocation5], 128, 128, 8
    $region5: #{tpu_custom_call.1} parent=1 // pred_fallthru
      _
    // Predicated region
    $region6: #{tpu_custom_call.1} parent=1 // pred_check
      _
    $region7: #{tpu_custom_call.1} parent=1 // pred_check_branch
      %30 = sbr.rel (0) target = $region9
    $region8: #{tpu_custom_call.1} parent=1 // pred_region
      %s32 = ssub.s32 2048, 2048
      %33 = vsyncadd [#allocation8], %s32
      %s34 = sshll.u32 [#allocation7], 4
      %s35 = int_to_ptr.vmem [resolvable:$true] %s34
      %40 = dma.hbm_to_vmem [thread:$0]  %s1, 2048, %s35, [#allocation8], 128, 128, 8
    $region9: #{tpu_custom_call.1} parent=1 // pred_fallthru
      _
    // Predicated region
    $region10: #{tpu_custom_call.1} parent=1 // pred_check
      _
    $region11: #{tpu_custom_call.1} parent=1 // pred_check_branch
      %42 = sbr.rel (0) target = $region13
    $region12: #{tpu_custom_call.1} parent=1 // pred_region
      %s44 = ssub.s32 2048, 2048
      %45 = vsyncadd [#allocation8], %s44
      %s46 = sshll.u32 [#allocation9], 4
      %s47 = int_to_ptr.vmem [resolvable:$true] %s46
      %52 = dma.hbm_to_vmem [thread:$0]  %s2, 2048, %s47, [#allocation8], 128, 128, 8
    $region13: #{tpu_custom_call.1} parent=1 // pred_fallthru
      _
    // Predicated region
    $region14: #{tpu_custom_call.1} parent=1 // pred_check
      _
    $region15: #{tpu_custom_call.1} parent=1 // pred_check_branch
      %54 = sbr.rel (0) target = $region17
    $region16: #{tpu_custom_call.1} parent=1 // pred_region
      %s56 = ssub.s32 16, 16
      %57 = vsyncadd [#allocation11], %s56
      %s59 = sshll.u32 [#allocation10], 4
      %s60 = int_to_ptr.vmem [resolvable:$true] %s59
      %62 = dma.hbm_to_vmem [thread:$0]  %s3, 16, %s60, [#allocation11]
    $region17: #{tpu_custom_call.1} parent=1 // pred_fallthru
      _
    // Predicated region
    $region18: #{tpu_custom_call.1} parent=1 // pred_check
      _
    $region19: #{tpu_custom_call.1} parent=1 // pred_check_branch
      %64 = sbr.rel (0) target = $region21
    $region20: #{tpu_custom_call.1} parent=1 // pred_region
      %s66 = ssub.s32 2048, 2048
      %67 = vsyncadd [#allocation11], %s66
      %s68 = sshll.u32 [#allocation12], 4
      %s69 = int_to_ptr.vmem [resolvable:$true] %s68
      %74 = dma.hbm_to_vmem [thread:$0]  %s4, 2048, %s69, [#allocation11], 128, 128, 8
    $region21: #{tpu_custom_call.1} parent=1 // pred_fallthru
      _
    // Predicated region
    $region22: #{tpu_custom_call.1} parent=1 // pred_check
      _
    $region23: #{tpu_custom_call.1} parent=1 // pred_check_branch
      %76 = sbr.rel (0) target = $region25
    $region24: #{tpu_custom_call.1} parent=1 // pred_region
      %s78 = ssub.s32 16, 16
      %79 = vsyncadd [#allocation14], %s78
      %s81 = sshll.u32 [#allocation13], 4
      %s82 = int_to_ptr.vmem [resolvable:$true] %s81
      %84 = dma.hbm_to_vmem [thread:$0]  %s5, 16, %s82, [#allocation14]
    $region25: #{tpu_custom_call.1} parent=1 // pred_fallthru
      _
    // Predicated region
    $region26: #{tpu_custom_call.1} parent=1 // pred_check
      _
    $region27: #{tpu_custom_call.1} parent=1 // pred_check_branch
      %86 = sbr.rel (0) target = $region29
    $region28: #{tpu_custom_call.1} parent=1 // pred_region
      %s88 = ssub.s32 2048, 2048
      %89 = vsyncadd [#allocation14], %s88
      %s90 = sshll.u32 [#allocation15], 4
      %s91 = int_to_ptr.vmem [resolvable:$true] %s90
      %96 = dma.hbm_to_vmem [thread:$0]  %s6, 2048, %s91, [#allocation14], 128, 128, 8
    $region29: #{tpu_custom_call.1} parent=1 // pred_fallthru
      _
    // Predicated region
    $region30: #{tpu_custom_call.1} parent=1 // pred_check
      _
    $region31: #{tpu_custom_call.1} parent=1 // pred_check_branch
      %98 = sbr.rel (0) target = $region33
    $region32: #{tpu_custom_call.1} parent=1 // pred_region
      %99 = dma.done [#allocation5], 2048
    $region33: #{tpu_custom_call.1} parent=1 // pred_fallthru
      _
    // Predicated region
    $region34: #{tpu_custom_call.1} parent=1 // pred_check
      _
    $region35: #{tpu_custom_call.1} parent=1 // pred_check_branch
      %101 = sbr.rel (0) target = $region37
    $region36: #{tpu_custom_call.1} parent=1 // pred_region
      %102 = dma.done [#allocation8], 2048
    $region37: #{tpu_custom_call.1} parent=1 // pred_fallthru
      _
    // Predicated region
    $region38: #{tpu_custom_call.1} parent=1 // pred_check
      _
    $region39: #{tpu_custom_call.1} parent=1 // pred_check_branch
      %104 = sbr.rel (0) target = $region41
    $region40: #{tpu_custom_call.1} parent=1 // pred_region
      %105 = dma.done [#allocation8], 2048
    $region41: #{tpu_custom_call.1} parent=1 // pred_fallthru
      _
    // Predicated region
    $region42: #{tpu_custom_call.1} parent=1 // pred_check
      _
    $region43: #{tpu_custom_call.1} parent=1 // pred_check_branch
      %107 = sbr.rel (0) target = $region45
    $region44: #{tpu_custom_call.1} parent=1 // pred_region
      %108 = dma.done [#allocation11], 16
    $region45: #{tpu_custom_call.1} parent=1 // pred_fallthru
      _
    // Predicated region
    $region46: #{tpu_custom_call.1} parent=1 // pred_check
      _
    $region47: #{tpu_custom_call.1} parent=1 // pred_check_branch
      %110 = sbr.rel (0) target = $region49
    $region48: #{tpu_custom_call.1} parent=1 // pred_region
      %111 = dma.done [#allocation11], 2048
    $region49: #{tpu_custom_call.1} parent=1 // pred_fallthru
      _
    // Predicated region
    $region50: #{tpu_custom_call.1} parent=1 // pred_check
      _
    $region51: #{tpu_custom_call.1} parent=1 // pred_check_branch
      %113 = sbr.rel (0) target = $region53
    $region52: #{tpu_custom_call.1} parent=1 // pred_region
      %114 = dma.done [#allocation14], 16
    $region53: #{tpu_custom_call.1} parent=1 // pred_fallthru
      _
    // Predicated region
    $region54: #{tpu_custom_call.1} parent=1 // pred_check
      _
    $region55: #{tpu_custom_call.1} parent=1 // pred_check_branch
      %116 = sbr.rel (0) target = $region57
    $region56: #{tpu_custom_call.1} parent=1 // pred_region
      %117 = dma.done [#allocation14], 2048
    $region57: #{tpu_custom_call.1} parent=1 // pred_fallthru
      _
    %p118 = scmp.eq.s32.totalorder 0, 0
    // Predicated region
    $region58: #{tpu_custom_call.1} parent=1 // pred_check
      %p119 = pneg %p118
    $region59: #{tpu_custom_call.1} parent=1 // pred_check_branch
      %121 = sbr.rel (%p119) target = $region61
    $region60: #{tpu_custom_call.1} parent=1 // pred_region
      %122 = vst [vmem:[#allocation2] sm:$0x1] 0.0
      %123 = vst [vmem:[#allocation3] sm:$0x1] 1e+30
    $region61: #{tpu_custom_call.1} parent=1 // pred_fallthru
      _
    %v124 = vld [vmem:[#allocation4] sm:$0xff]
    %v125 = vld [vmem:[#allocation4 + $0x8] sm:$0xff]
    %v126 = vld [vmem:[#allocation4 + $0x10] sm:$0xff]
    %v127 = vld [vmem:[#allocation4 + $0x18] sm:$0xff]
    %v128 = vld [vmem:[#allocation4 + $0x20] sm:$0xff]
    %v129 = vld [vmem:[#allocation4 + $0x28] sm:$0xff]
    %v130 = vld [vmem:[#allocation4 + $0x30] sm:$0xff]
    %v131 = vld [vmem:[#allocation4 + $0x38] sm:$0xff]
    %v132 = vld [vmem:[#allocation4 + $0x40] sm:$0xff]
    %v133 = vld [vmem:[#allocation4 + $0x48] sm:$0xff]
    %v134 = vld [vmem:[#allocation4 + $0x50] sm:$0xff]
    %v135 = vld [vmem:[#allocation4 + $0x58] sm:$0xff]
    %v136 = vld [vmem:[#allocation4 + $0x60] sm:$0xff]
    %v137 = vld [vmem:[#allocation4 + $0x68] sm:$0xff]
    %v138 = vld [vmem:[#allocation4 + $0x70] sm:$0xff]
    %v139 = vld [vmem:[#allocation4 + $0x78] sm:$0xff]
    %v140 = vld [vmem:[#allocation7] sm:$0xff]
    %v141 = vld [vmem:[#allocation7 + $0x8] sm:$0xff]
    %v142 = vld [vmem:[#allocation7 + $0x10] sm:$0xff]
    %v143 = vld [vmem:[#allocation7 + $0x18] sm:$0xff]
    %v144 = vld [vmem:[#allocation7 + $0x20] sm:$0xff]
    %v145 = vld [vmem:[#allocation7 + $0x28] sm:$0xff]
    %v146 = vld [vmem:[#allocation7 + $0x30] sm:$0xff]
    %v147 = vld [vmem:[#allocation7 + $0x38] sm:$0xff]
    %v148 = vld [vmem:[#allocation7 + $0x40] sm:$0xff]
    %v149 = vld [vmem:[#allocation7 + $0x48] sm:$0xff]
    %v150 = vld [vmem:[#allocation7 + $0x50] sm:$0xff]
    %v151 = vld [vmem:[#allocation7 + $0x58] sm:$0xff]
    %v152 = vld [vmem:[#allocation7 + $0x60] sm:$0xff]
    %v153 = vld [vmem:[#allocation7 + $0x68] sm:$0xff]
    %v154 = vld [vmem:[#allocation7 + $0x70] sm:$0xff]
    %v155 = vld [vmem:[#allocation7 + $0x78] sm:$0xff]
    %vm156 = vcmask 130048
    %v158 = vsel %vm156, %v124, 0
    %v161 = vsel %vm156, %v125, 0
    %v164 = vsel %vm156, %v126, 0
    %v167 = vsel %vm156, %v127, 0
    %v170 = vsel %vm156, %v128, 0
    %v173 = vsel %vm156, %v129, 0
    %v176 = vsel %vm156, %v130, 0
    %v179 = vsel %vm156, %v131, 0
    %v182 = vsel %vm156, %v132, 0
    %v185 = vsel %vm156, %v133, 0
    %v188 = vsel %vm156, %v134, 0
    %v191 = vsel %vm156, %v135, 0
    %v194 = vsel %vm156, %v136, 0
    %v197 = vsel %vm156, %v137, 0
    %v200 = vsel %vm156, %v138, 0
    %v203 = vsel %vm156, %v139, 0
    %v206 = vsel %vm156, %v140, 0
    %v209 = vsel %vm156, %v141, 0
    %v212 = vsel %vm156, %v142, 0
    %v215 = vsel %vm156, %v143, 0
    %v218 = vsel %vm156, %v144, 0
    %v221 = vsel %vm156, %v145, 0
    %v224 = vsel %vm156, %v146, 0
    %v227 = vsel %vm156, %v147, 0
    %v230 = vsel %vm156, %v148, 0
    %v233 = vsel %vm156, %v149, 0
    %v236 = vsel %vm156, %v150, 0
    %v239 = vsel %vm156, %v151, 0
    %v242 = vsel %vm156, %v152, 0
    %v245 = vsel %vm156, %v153, 0
    %v248 = vsel %vm156, %v154, 0
    %v251 = vsel %vm156, %v155, 0
    %253 = vmatprep.subr.mxu0 0.0
    %254 = vmatpush1.xpose.msra.mxu0 %v206
    %255 = vmatprep.subr.mxu0 0.0
    %256 = vmatpush1.xpose.msra.mxu0 %v209
    %257 = vmatprep.subr.mxu0 0.0
    %258 = vmatpush1.xpose.msra.mxu0 %v212
    %259 = vmatprep.subr.mxu0 0.0
    %260 = vmatpush1.xpose.msra.mxu0 %v215
    %261 = vmatprep.subr.mxu0 0.0
    %262 = vmatpush1.xpose.msra.mxu0 %v218
    %263 = vmatprep.subr.mxu0 0.0
    %264 = vmatpush1.xpose.msra.mxu0 %v221
    %265 = vmatprep.subr.mxu0 0.0
    %266 = vmatpush1.xpose.msra.mxu0 %v224
    %267 = vmatprep.subr.mxu0 0.0
    %268 = vmatpush1.xpose.msra.mxu0 %v227
    %269 = vmatprep.subr.mxu0 0.0
    %270 = vmatpush1.xpose.msra.mxu0 %v230
    %271 = vmatprep.subr.mxu0 0.0
    %272 = vmatpush1.xpose.msra.mxu0 %v233
    %273 = vmatprep.subr.mxu0 0.0
    %274 = vmatpush1.xpose.msra.mxu0 %v236
    %275 = vmatprep.subr.mxu0 0.0
    %276 = vmatpush1.xpose.msra.mxu0 %v239
    %277 = vmatprep.subr.mxu0 0.0
    %278 = vmatpush1.xpose.msra.mxu0 %v242
    %279 = vmatprep.subr.mxu0 0.0
    %280 = vmatpush1.xpose.msra.mxu0 %v245
    %281 = vmatprep.subr.mxu0 0.0
    %282 = vmatpush1.xpose.msra.mxu0 %v248
    %283 = vmatprep.subr.mxu0 0.0
    %284 = vmatpush1.xpose.msra.mxu0 %v251
    %285 = vmatprep.subr.mxu0 0.0
    %286 = vmatpush1.xpose.msra.mxu0 0.0
    %287 = vmatprep.subr.mxu0 0.0
    %288 = vmatpush1.xpose.msra.mxu0 0.0
    %289 = vmatprep.subr.mxu0 0.0
    %290 = vmatpush1.xpose.msra.mxu0 0.0
    %291 = vmatprep.subr.mxu0 0.0
    %292 = vmatpush1.xpose.msra.mxu0 0.0
    %293 = vmatprep.subr.mxu0 0.0
    %294 = vmatpush1.xpose.msra.mxu0 0.0
    %295 = vmatprep.subr.mxu0 0.0
    %296 = vmatpush1.xpose.msra.mxu0 0.0
    %297 = vmatprep.subr.mxu0 0.0
    %298 = vmatpush1.xpose.msra.mxu0 0.0
    %299 = vmatprep.subr.mxu0 0.0
    %300 = vmatpush1.xpose.msra.mxu0 0.0
    %301 = vmatprep.subr.mxu0 0.0
    %302 = vmatpush1.xpose.msra.mxu0 0.0
    %303 = vmatprep.subr.mxu0 0.0
    %304 = vmatpush1.xpose.msra.mxu0 0.0
    %305 = vmatprep.subr.mxu0 0.0
    %306 = vmatpush1.xpose.msra.mxu0 0.0
    %307 = vmatprep.subr.mxu0 0.0
    %308 = vmatpush1.xpose.msra.mxu0 0.0
    %309 = vmatprep.subr.mxu0 0.0
    %310 = vmatpush1.xpose.msra.mxu0 0.0
    %311 = vmatprep.subr.mxu0 0.0
    %312 = vmatpush1.xpose.msra.mxu0 0.0
    %313 = vmatprep.subr.mxu0 0.0
    %314 = vmatpush1.xpose.msra.mxu0 0.0
    %315 = vmatprep.subr.mxu0 0.0
    %316 = vmatpush1.xpose.msra.mxu0 0.0
    %317 = vmatprep.mubr.f32.mxu0 0.0
    %318 = vmatmul.mubr.f32.gmra.mrb[0].mxu0 %v158
    %v319 = vpop.f32.mrb[0].mxu0
    %v320 = vadd.f32 0.0, %v319
    %v321 = vpop.f32.mrb[0].mxu0
    %322 = vmatprep.mubr.f32.mxu0 0.0
    %323 = vmatmul.mubr.f32.gmra.mrb[0].mxu0 %v161
    %v324 = vpop.f32.mrb[0].mxu0
    %v325 = vadd.f32 0.0, %v324
    %v326 = vpop.f32.mrb[0].mxu0
    %327 = vmatprep.mubr.f32.mxu0 0.0
    %328 = vmatmul.mubr.f32.gmra.mrb[0].mxu0 %v164
    %v329 = vpop.f32.mrb[0].mxu0
    %v330 = vadd.f32 0.0, %v329
    %v331 = vpop.f32.mrb[0].mxu0
    %332 = vmatprep.mubr.f32.mxu0 0.0
    %333 = vmatmul.mubr.f32.gmra.mrb[0].mxu0 %v167
    %v334 = vpop.f32.mrb[0].mxu0
    %v335 = vadd.f32 0.0, %v334
    %v336 = vpop.f32.mrb[0].mxu0
    %337 = vmatprep.mubr.f32.mxu0 0.0
    %338 = vmatmul.mubr.f32.gmra.mrb[0].mxu0 %v170
    %v339 = vpop.f32.mrb[0].mxu0
    %v340 = vadd.f32 0.0, %v339
    %v341 = vpop.f32.mrb[0].mxu0
    %342 = vmatprep.mubr.f32.mxu0 0.0
    %343 = vmatmul.mubr.f32.gmra.mrb[0].mxu0 %v173
    %v344 = vpop.f32.mrb[0].mxu0
    %v345 = vadd.f32 0.0, %v344
    %v346 = vpop.f32.mrb[0].mxu0
    %347 = vmatprep.mubr.f32.mxu0 0.0
    %348 = vmatmul.mubr.f32.gmra.mrb[0].mxu0 %v176
    %v349 = vpop.f32.mrb[0].mxu0
    %v350 = vadd.f32 0.0, %v349
    %v351 = vpop.f32.mrb[0].mxu0
    %352 = vmatprep.mubr.f32.mxu0 0.0
    %353 = vmatmul.mubr.f32.gmra.mrb[0].mxu0 %v179
    %v354 = vpop.f32.mrb[0].mxu0
    %v355 = vadd.f32 0.0, %v354
    %v356 = vpop.f32.mrb[0].mxu0
    %357 = vmatprep.mubr.f32.mxu0 0.0
    %358 = vmatmul.mubr.f32.gmra.mrb[0].mxu0 %v182
    %v359 = vpop.f32.mrb[0].mxu0
    %v360 = vadd.f32 0.0, %v359
    %v361 = vpop.f32.mrb[0].mxu0
    %362 = vmatprep.mubr.f32.mxu0 0.0
    %363 = vmatmul.mubr.f32.gmra.mrb[0].mxu0 %v185
    %v364 = vpop.f32.mrb[0].mxu0
    %v365 = vadd.f32 0.0, %v364
    %v366 = vpop.f32.mrb[0].mxu0
    %367 = vmatprep.mubr.f32.mxu0 0.0
    %368 = vmatmul.mubr.f32.gmra.mrb[0].mxu0 %v188
    %v369 = vpop.f32.mrb[0].mxu0
    %v370 = vadd.f32 0.0, %v369
    %v371 = vpop.f32.mrb[0].mxu0
    %372 = vmatprep.mubr.f32.mxu0 0.0
    %373 = vmatmul.mubr.f32.gmra.mrb[0].mxu0 %v191
    %v374 = vpop.f32.mrb[0].mxu0
    %v375 = vadd.f32 0.0, %v374
    %v376 = vpop.f32.mrb[0].mxu0
    %377 = vmatprep.mubr.f32.mxu0 0.0
    %378 = vmatmul.mubr.f32.gmra.mrb[0].mxu0 %v194
    %v379 = vpop.f32.mrb[0].mxu0
    %v380 = vadd.f32 0.0, %v379
    %v381 = vpop.f32.mrb[0].mxu0
    %382 = vmatprep.mubr.f32.mxu0 0.0
    %383 = vmatmul.mubr.f32.gmra.mrb[0].mxu0 %v197
    %v384 = vpop.f32.mrb[0].mxu0
    %v385 = vadd.f32 0.0, %v384
    %v386 = vpop.f32.mrb[0].mxu0
    %387 = vmatprep.mubr.f32.mxu0 0.0
    %388 = vmatmul.mubr.f32.gmra.mrb[0].mxu0 %v200
    %v389 = vpop.f32.mrb[0].mxu0
    %v390 = vadd.f32 0.0, %v389
    %v391 = vpop.f32.mrb[0].mxu0
    %392 = vmatprep.mubr.f32.mxu0 0.0
    %393 = vmatmul.mubr.f32.gmra.mrb[0].mxu0 %v203
    %v394 = vpop.f32.mrb[0].mxu0
    %v395 = vadd.f32 0.0, %v394
    %v396 = vpop.f32.mrb[0].mxu0
    %397 = vdwg.mxu0
    %v398 = vld [vmem:[#allocation9] sm:$0xff]
    %v399 = vld [vmem:[#allocation9 + $0x8] sm:$0xff]
    %v400 = vld [vmem:[#allocation9 + $0x10] sm:$0xff]
    %v401 = vld [vmem:[#allocation9 + $0x18] sm:$0xff]
    %v402 = vld [vmem:[#allocation9 + $0x20] sm:$0xff]
    %v403 = vld [vmem:[#allocation9 + $0x28] sm:$0xff]
    %v404 = vld [vmem:[#allocation9 + $0x30] sm:$0xff]
    %v405 = vld [vmem:[#allocation9 + $0x38] sm:$0xff]
    %v406 = vld [vmem:[#allocation9 + $0x40] sm:$0xff]
    %v407 = vld [vmem:[#allocation9 + $0x48] sm:$0xff]
    %v408 = vld [vmem:[#allocation9 + $0x50] sm:$0xff]
    %v409 = vld [vmem:[#allocation9 + $0x58] sm:$0xff]
    %v410 = vld [vmem:[#allocation9 + $0x60] sm:$0xff]
    %v411 = vld [vmem:[#allocation9 + $0x68] sm:$0xff]
    %v412 = vld [vmem:[#allocation9 + $0x70] sm:$0xff]
    %v413 = vld [vmem:[#allocation9 + $0x78] sm:$0xff]
    %v414 = vld [vmem:[#allocation10] sm:$0x1]
    %416 = vset.pattern.permute.xlu0 0
    %417 = vperm.xlu0 %416, %v398
    %v418 = vpop.permute.xlu0 %417
    %421 = vset.pattern.permute.xlu0 0
    %422 = vperm.xlu0 %421, %v399
    %v423 = vpop.permute.xlu0 %422
    %426 = vset.pattern.permute.xlu0 0
    %427 = vperm.xlu0 %426, %v400
    %v428 = vpop.permute.xlu0 %427
    %431 = vset.pattern.permute.xlu0 0
    %432 = vperm.xlu0 %431, %v401
    %v433 = vpop.permute.xlu0 %432
    %436 = vset.pattern.permute.xlu0 0
    %437 = vperm.xlu0 %436, %v402
    %v438 = vpop.permute.xlu0 %437
    %441 = vset.pattern.permute.xlu0 0
    %442 = vperm.xlu0 %441, %v403
    %v443 = vpop.permute.xlu0 %442
    %446 = vset.pattern.permute.xlu0 0
    %447 = vperm.xlu0 %446, %v404
    %v448 = vpop.permute.xlu0 %447
    %451 = vset.pattern.permute.xlu0 0
    %452 = vperm.xlu0 %451, %v405
    %v453 = vpop.permute.xlu0 %452
    %456 = vset.pattern.permute.xlu0 0
    %457 = vperm.xlu0 %456, %v406
    %v458 = vpop.permute.xlu0 %457
    %461 = vset.pattern.permute.xlu0 0
    %462 = vperm.xlu0 %461, %v407
    %v463 = vpop.permute.xlu0 %462
    %466 = vset.pattern.permute.xlu0 0
    %467 = vperm.xlu0 %466, %v408
    %v468 = vpop.permute.xlu0 %467
    %471 = vset.pattern.permute.xlu0 0
    %472 = vperm.xlu0 %471, %v409
    %v473 = vpop.permute.xlu0 %472
    %476 = vset.pattern.permute.xlu0 0
    %477 = vperm.xlu0 %476, %v410
    %v478 = vpop.permute.xlu0 %477
    %481 = vset.pattern.permute.xlu0 0
    %482 = vperm.xlu0 %481, %v411
    %v483 = vpop.permute.xlu0 %482
    %486 = vset.pattern.permute.xlu0 0
    %487 = vperm.xlu0 %486, %v412
    %v488 = vpop.permute.xlu0 %487
    %491 = vset.pattern.permute.xlu0 0
    %492 = vperm.xlu0 %491, %v413
    %v493 = vpop.permute.xlu0 %492
    %v496 = vlaneseq
    %v497 = vshrl.u32 %v496, 7
    %v498 = vsub.s32 0, %v497
    %v499 = vrot.slane %v414, %v498
    %v501 = vadd.f32 %v418, %v499
    %v502 = vadd.f32 %v423, %v499
    %v503 = vadd.f32 %v428, %v499
    %v504 = vadd.f32 %v433, %v499
    %v505 = vadd.f32 %v438, %v499
    %v506 = vadd.f32 %v443, %v499
    %v507 = vadd.f32 %v448, %v499
    %v508 = vadd.f32 %v453, %v499
    %v509 = vadd.f32 %v458, %v499
    %v510 = vadd.f32 %v463, %v499
    %v511 = vadd.f32 %v468, %v499
    %v512 = vadd.f32 %v473, %v499
    %v513 = vadd.f32 %v478, %v499
    %v514 = vadd.f32 %v483, %v499
    %v515 = vadd.f32 %v488, %v499
    %v516 = vadd.f32 %v493, %v499
    %v517 = vmul.f32 %v320, 2.0
    %v518 = vmul.f32 %v325, 2.0
    %v519 = vmul.f32 %v330, 2.0
    %v520 = vmul.f32 %v335, 2.0
    %v521 = vmul.f32 %v340, 2.0
    %v522 = vmul.f32 %v345, 2.0
    %v523 = vmul.f32 %v350, 2.0
    %v524 = vmul.f32 %v355, 2.0
    %v525 = vmul.f32 %v360, 2.0
    %v526 = vmul.f32 %v365, 2.0
    %v527 = vmul.f32 %v370, 2.0
    %v528 = vmul.f32 %v375, 2.0
    %v529 = vmul.f32 %v380, 2.0
    %v530 = vmul.f32 %v385, 2.0
    %v531 = vmul.f32 %v390, 2.0
    %v532 = vmul.f32 %v395, 2.0
    %v533 = vsub.f32 %v501, %v517
    %v534 = vsub.f32 %v502, %v518
    %v535 = vsub.f32 %v503, %v519
    %v536 = vsub.f32 %v504, %v520
    %v537 = vsub.f32 %v505, %v521
    %v538 = vsub.f32 %v506, %v522
    %v539 = vsub.f32 %v507, %v523
    %v540 = vsub.f32 %v508, %v524
    %v541 = vsub.f32 %v509, %v525
    %v542 = vsub.f32 %v510, %v526
    %v543 = vsub.f32 %v511, %v527
    %v544 = vsub.f32 %v512, %v528
    %v545 = vsub.f32 %v513, %v529
    %v546 = vsub.f32 %v514, %v530
    %v547 = vsub.f32 %v515, %v531
    %v548 = vsub.f32 %v516, %v532
    %v549 = vmax.f32 %v533, 0.0
    %v550 = vmax.f32 %v534, 0.0
    %v551 = vmax.f32 %v535, 0.0
    %v552 = vmax.f32 %v536, 0.0
    %v553 = vmax.f32 %v537, 0.0
    %v554 = vmax.f32 %v538, 0.0
    %v555 = vmax.f32 %v539, 0.0
    %v556 = vmax.f32 %v540, 0.0
    %v557 = vmax.f32 %v541, 0.0
    %v558 = vmax.f32 %v542, 0.0
    %v559 = vmax.f32 %v543, 0.0
    %v560 = vmax.f32 %v544, 0.0
    %v561 = vmax.f32 %v545, 0.0
    %v562 = vmax.f32 %v546, 0.0
    %v563 = vmax.f32 %v547, 0.0
    %v564 = vmax.f32 %v548, 0.0
    %v565 = vadd.f32 %v549, 1e-12
    %v566 = vadd.f32 %v550, 1e-12
    %v567 = vadd.f32 %v551, 1e-12
    %v568 = vadd.f32 %v552, 1e-12
    %v569 = vadd.f32 %v553, 1e-12
    %v570 = vadd.f32 %v554, 1e-12
    %v571 = vadd.f32 %v555, 1e-12
    %v572 = vadd.f32 %v556, 1e-12
    %v573 = vadd.f32 %v557, 1e-12
    %v574 = vadd.f32 %v558, 1e-12
    %v575 = vadd.f32 %v559, 1e-12
    %v576 = vadd.f32 %v560, 1e-12
    %v577 = vadd.f32 %v561, 1e-12
    %v578 = vadd.f32 %v562, 1e-12
    %v579 = vadd.f32 %v563, 1e-12
    %v580 = vadd.f32 %v564, 1e-12
    %v581 = vrsqrt.pop %v565
    %v582 = vmul.f32 %v565, %v581
    %vm583 = vcmp.eq.f32.partialorder %v565, inf
    %v584 = vsel %vm583, %v565, %v582
    %vm585 = vcmp.eq.f32.partialorder %v565, 0.0
    %v586 = vand.u32 %v565, 2147483648
    %v587 = vsel %vm585, %v586, %v584
    %v588 = vrsqrt.pop %v566
    %v589 = vmul.f32 %v566, %v588
    %vm590 = vcmp.eq.f32.partialorder %v566, inf
    %v591 = vsel %vm590, %v566, %v589
    %vm592 = vcmp.eq.f32.partialorder %v566, 0.0
    %v593 = vand.u32 %v566, 2147483648
    %v594 = vsel %vm592, %v593, %v591
    %v595 = vrsqrt.pop %v567
    %v596 = vmul.f32 %v567, %v595
    %vm597 = vcmp.eq.f32.partialorder %v567, inf
    %v598 = vsel %vm597, %v567, %v596
    %vm599 = vcmp.eq.f32.partialorder %v567, 0.0
    %v600 = vand.u32 %v567, 2147483648
    %v601 = vsel %vm599, %v600, %v598
    %v602 = vrsqrt.pop %v568
    %v603 = vmul.f32 %v568, %v602
    %vm604 = vcmp.eq.f32.partialorder %v568, inf
    %v605 = vsel %vm604, %v568, %v603
    %vm606 = vcmp.eq.f32.partialorder %v568, 0.0
    %v607 = vand.u32 %v568, 2147483648
    %v608 = vsel %vm606, %v607, %v605
    %v609 = vrsqrt.pop %v569
    %v610 = vmul.f32 %v569, %v609
    %vm611 = vcmp.eq.f32.partialorder %v569, inf
    %v612 = vsel %vm611, %v569, %v610
    %vm613 = vcmp.eq.f32.partialorder %v569, 0.0
    %v614 = vand.u32 %v569, 2147483648
    %v615 = vsel %vm613, %v614, %v612
    %v616 = vrsqrt.pop %v570
    %v617 = vmul.f32 %v570, %v616
    %vm618 = vcmp.eq.f32.partialorder %v570, inf
    %v619 = vsel %vm618, %v570, %v617
    %vm620 = vcmp.eq.f32.partialorder %v570, 0.0
    %v621 = vand.u32 %v570, 2147483648
    %v622 = vsel %vm620, %v621, %v619
    %v623 = vrsqrt.pop %v571
    %v624 = vmul.f32 %v571, %v623
    %vm625 = vcmp.eq.f32.partialorder %v571, inf
    %v626 = vsel %vm625, %v571, %v624
    %vm627 = vcmp.eq.f32.partialorder %v571, 0.0
    %v628 = vand.u32 %v571, 2147483648
    %v629 = vsel %vm627, %v628, %v626
    %v630 = vrsqrt.pop %v572
    %v631 = vmul.f32 %v572, %v630
    %vm632 = vcmp.eq.f32.partialorder %v572, inf
    %v633 = vsel %vm632, %v572, %v631
    %vm634 = vcmp.eq.f32.partialorder %v572, 0.0
    %v635 = vand.u32 %v572, 2147483648
    %v636 = vsel %vm634, %v635, %v633
    %v637 = vrsqrt.pop %v573
    %v638 = vmul.f32 %v573, %v637
    %vm639 = vcmp.eq.f32.partialorder %v573, inf
    %v640 = vsel %vm639, %v573, %v638
    %vm641 = vcmp.eq.f32.partialorder %v573, 0.0
    %v642 = vand.u32 %v573, 2147483648
    %v643 = vsel %vm641, %v642, %v640
    %v644 = vrsqrt.pop %v574
    %v645 = vmul.f32 %v574, %v644
    %vm646 = vcmp.eq.f32.partialorder %v574, inf
    %v647 = vsel %vm646, %v574, %v645
    %vm648 = vcmp.eq.f32.partialorder %v574, 0.0
    %v649 = vand.u32 %v574, 2147483648
    %v650 = vsel %vm648, %v649, %v647
    %v651 = vrsqrt.pop %v575
    %v652 = vmul.f32 %v575, %v651
    %vm653 = vcmp.eq.f32.partialorder %v575, inf
    %v654 = vsel %vm653, %v575, %v652
    %vm655 = vcmp.eq.f32.partialorder %v575, 0.0
    %v656 = vand.u32 %v575, 2147483648
    %v657 = vsel %vm655, %v656, %v654
    %v658 = vrsqrt.pop %v576
    %v659 = vmul.f32 %v576, %v658
    %vm660 = vcmp.eq.f32.partialorder %v576, inf
    %v661 = vsel %vm660, %v576, %v659
    %vm662 = vcmp.eq.f32.partialorder %v576, 0.0
    %v663 = vand.u32 %v576, 2147483648
    %v664 = vsel %vm662, %v663, %v661
    %v665 = vrsqrt.pop %v577
    %v666 = vmul.f32 %v577, %v665
    %vm667 = vcmp.eq.f32.partialorder %v577, inf
    %v668 = vsel %vm667, %v577, %v666
    %vm669 = vcmp.eq.f32.partialorder %v577, 0.0
    %v670 = vand.u32 %v577, 2147483648
    %v671 = vsel %vm669, %v670, %v668
    %v672 = vrsqrt.pop %v578
    %v673 = vmul.f32 %v578, %v672
    %vm674 = vcmp.eq.f32.partialorder %v578, inf
    %v675 = vsel %vm674, %v578, %v673
    %vm676 = vcmp.eq.f32.partialorder %v578, 0.0
    %v677 = vand.u32 %v578, 2147483648
    %v678 = vsel %vm676, %v677, %v675
    %v679 = vrsqrt.pop %v579
    %v680 = vmul.f32 %v579, %v679
    %vm681 = vcmp.eq.f32.partialorder %v579, inf
    %v682 = vsel %vm681, %v579, %v680
    %vm683 = vcmp.eq.f32.partialorder %v579, 0.0
    %v684 = vand.u32 %v579, 2147483648
    %v685 = vsel %vm683, %v684, %v682
    %v686 = vrsqrt.pop %v580
    %v687 = vmul.f32 %v580, %v686
    %vm688 = vcmp.eq.f32.partialorder %v580, inf
    %v689 = vsel %vm688, %v580, %v687
    %vm690 = vcmp.eq.f32.partialorder %v580, 0.0
    %v691 = vand.u32 %v580, 2147483648
    %v692 = vsel %vm690, %v691, %v689
    %v693 = vld [vmem:[#allocation12] sm:$0xff]
    %v694 = vld [vmem:[#allocation12 + $0x8] sm:$0xff]
    %v695 = vld [vmem:[#allocation12 + $0x10] sm:$0xff]
    %v696 = vld [vmem:[#allocation12 + $0x18] sm:$0xff]
    %v697 = vld [vmem:[#allocation12 + $0x20] sm:$0xff]
    %v698 = vld [vmem:[#allocation12 + $0x28] sm:$0xff]
    %v699 = vld [vmem:[#allocation12 + $0x30] sm:$0xff]
    %v700 = vld [vmem:[#allocation12 + $0x38] sm:$0xff]
    %v701 = vld [vmem:[#allocation12 + $0x40] sm:$0xff]
    %v702 = vld [vmem:[#allocation12 + $0x48] sm:$0xff]
    %v703 = vld [vmem:[#allocation12 + $0x50] sm:$0xff]
    %v704 = vld [vmem:[#allocation12 + $0x58] sm:$0xff]
    %v705 = vld [vmem:[#allocation12 + $0x60] sm:$0xff]
    %v706 = vld [vmem:[#allocation12 + $0x68] sm:$0xff]
    %v707 = vld [vmem:[#allocation12 + $0x70] sm:$0xff]
    %v708 = vld [vmem:[#allocation12 + $0x78] sm:$0xff]
    %v709 = vld [vmem:[#allocation13] sm:$0x1]
    %710 = vset.pattern.permute.xlu0 0
    %711 = vperm.xlu0 %710, %v693
    %v712 = vpop.permute.xlu0 %711
    %713 = vset.pattern.permute.xlu0 0
    %714 = vperm.xlu0 %713, %v694
    %v715 = vpop.permute.xlu0 %714
    %716 = vset.pattern.permute.xlu0 0
    %717 = vperm.xlu0 %716, %v695
    %v718 = vpop.permute.xlu0 %717
    %719 = vset.pattern.permute.xlu0 0
    %720 = vperm.xlu0 %719, %v696
    %v721 = vpop.permute.xlu0 %720
    %722 = vset.pattern.permute.xlu0 0
    %723 = vperm.xlu0 %722, %v697
    %v724 = vpop.permute.xlu0 %723
    %725 = vset.pattern.permute.xlu0 0
    %726 = vperm.xlu0 %725, %v698
    %v727 = vpop.permute.xlu0 %726
    %728 = vset.pattern.permute.xlu0 0
    %729 = vperm.xlu0 %728, %v699
    %v730 = vpop.permute.xlu0 %729
    %731 = vset.pattern.permute.xlu0 0
    %732 = vperm.xlu0 %731, %v700
    %v733 = vpop.permute.xlu0 %732
    %734 = vset.pattern.permute.xlu0 0
    %735 = vperm.xlu0 %734, %v701
    %v736 = vpop.permute.xlu0 %735
    %737 = vset.pattern.permute.xlu0 0
    %738 = vperm.xlu0 %737, %v702
    %v739 = vpop.permute.xlu0 %738
    %740 = vset.pattern.permute.xlu0 0
    %741 = vperm.xlu0 %740, %v703
    %v742 = vpop.permute.xlu0 %741
    %743 = vset.pattern.permute.xlu0 0
    %744 = vperm.xlu0 %743, %v704
    %v745 = vpop.permute.xlu0 %744
    %746 = vset.pattern.permute.xlu0 0
    %747 = vperm.xlu0 %746, %v705
    %v748 = vpop.permute.xlu0 %747
    %749 = vset.pattern.permute.xlu0 0
    %750 = vperm.xlu0 %749, %v706
    %v751 = vpop.permute.xlu0 %750
    %752 = vset.pattern.permute.xlu0 0
    %753 = vperm.xlu0 %752, %v707
    %v754 = vpop.permute.xlu0 %753
    %755 = vset.pattern.permute.xlu0 0
    %756 = vperm.xlu0 %755, %v708
    %v757 = vpop.permute.xlu0 %756
    %v758 = vlaneseq
    %v759 = vshrl.u32 %v758, 7
    %v760 = vsub.s32 0, %v759
    %v761 = vrot.slane %v709, %v760
    %vm762 = vcmp.eq.s32.totalorder %v712, %v761
    %vm763 = vcmp.eq.s32.totalorder %v715, %v761
    %vm764 = vcmp.eq.s32.totalorder %v718, %v761
    %vm765 = vcmp.eq.s32.totalorder %v721, %v761
    %vm766 = vcmp.eq.s32.totalorder %v724, %v761
    %vm767 = vcmp.eq.s32.totalorder %v727, %v761
    %vm768 = vcmp.eq.s32.totalorder %v730, %v761
    %vm769 = vcmp.eq.s32.totalorder %v733, %v761
    %vm770 = vcmp.eq.s32.totalorder %v736, %v761
    %vm771 = vcmp.eq.s32.totalorder %v739, %v761
    %vm772 = vcmp.eq.s32.totalorder %v742, %v761
    %vm773 = vcmp.eq.s32.totalorder %v745, %v761
    %vm774 = vcmp.eq.s32.totalorder %v748, %v761
    %vm775 = vcmp.eq.s32.totalorder %v751, %v761
    %vm776 = vcmp.eq.s32.totalorder %v754, %v761
    %vm777 = vcmp.eq.s32.totalorder %v757, %v761
    %v778 = vsel %vm762, %v587, 0.0
    %v779 = vsel %vm763, %v594, 0.0
    %v780 = vsel %vm764, %v601, 0.0
    %v781 = vsel %vm765, %v608, 0.0
    %v782 = vsel %vm766, %v615, 0.0
    %v783 = vsel %vm767, %v622, 0.0
    %v784 = vsel %vm768, %v629, 0.0
    %v785 = vsel %vm769, %v636, 0.0
    %v786 = vsel %vm770, %v643, 0.0
    %v787 = vsel %vm771, %v650, 0.0
    %v788 = vsel %vm772, %v657, 0.0
    %v789 = vsel %vm773, %v664, 0.0
    %v790 = vsel %vm774, %v671, 0.0
    %v791 = vsel %vm775, %v678, 0.0
    %v792 = vsel %vm776, %v685, 0.0
    %v793 = vsel %vm777, %v692, 0.0
    %v794 = vsel %vm762, 9999.9, 0.0
    %v795 = vsel %vm763, 9999.9, 0.0
    %v796 = vsel %vm764, 9999.9, 0.0
    %v797 = vsel %vm765, 9999.9, 0.0
    %v798 = vsel %vm766, 9999.9, 0.0
    %v799 = vsel %vm767, 9999.9, 0.0
    %v800 = vsel %vm768, 9999.9, 0.0
    %v801 = vsel %vm769, 9999.9, 0.0
    %v802 = vsel %vm770, 9999.9, 0.0
    %v803 = vsel %vm771, 9999.9, 0.0
    %v804 = vsel %vm772, 9999.9, 0.0
    %v805 = vsel %vm773, 9999.9, 0.0
    %v806 = vsel %vm774, 9999.9, 0.0
    %v807 = vsel %vm775, 9999.9, 0.0
    %v808 = vsel %vm776, 9999.9, 0.0
    %v809 = vsel %vm777, 9999.9, 0.0
    %v810 = vadd.f32 %v587, %v794
    %v811 = vadd.f32 %v594, %v795
    %v812 = vadd.f32 %v601, %v796
    %v813 = vadd.f32 %v608, %v797
    %v814 = vadd.f32 %v615, %v798
    %v815 = vadd.f32 %v622, %v799
    %v816 = vadd.f32 %v629, %v800
    %v817 = vadd.f32 %v636, %v801
    %v818 = vadd.f32 %v643, %v802
    %v819 = vadd.f32 %v650, %v803
    %v820 = vadd.f32 %v657, %v804
    %v821 = vadd.f32 %v664, %v805
    %v822 = vadd.f32 %v671, %v806
    %v823 = vadd.f32 %v678, %v807
    %v824 = vadd.f32 %v685, %v808
    %v825 = vadd.f32 %v692, %v809
    %v826 = vld [vmem:[#allocation15] sm:$0xff]
    %v827 = vld [vmem:[#allocation15 + $0x8] sm:$0xff]
    %v828 = vld [vmem:[#allocation15 + $0x10] sm:$0xff]
    %v829 = vld [vmem:[#allocation15 + $0x18] sm:$0xff]
    %v830 = vld [vmem:[#allocation15 + $0x20] sm:$0xff]
    %v831 = vld [vmem:[#allocation15 + $0x28] sm:$0xff]
    %v832 = vld [vmem:[#allocation15 + $0x30] sm:$0xff]
    %v833 = vld [vmem:[#allocation15 + $0x38] sm:$0xff]
    %v834 = vld [vmem:[#allocation15 + $0x40] sm:$0xff]
    %v835 = vld [vmem:[#allocation15 + $0x48] sm:$0xff]
    %v836 = vld [vmem:[#allocation15 + $0x50] sm:$0xff]
    %v837 = vld [vmem:[#allocation15 + $0x58] sm:$0xff]
    %v838 = vld [vmem:[#allocation15 + $0x60] sm:$0xff]
    %v839 = vld [vmem:[#allocation15 + $0x68] sm:$0xff]
    %v840 = vld [vmem:[#allocation15 + $0x70] sm:$0xff]
    %v841 = vld [vmem:[#allocation15 + $0x78] sm:$0xff]
    %843 = vset.pattern.permute.xlu0 0
    %844 = vperm.xlu0 %843, %v826
    %v845 = vpop.permute.xlu0 %844
    %848 = vset.pattern.permute.xlu0 0
    %849 = vperm.xlu0 %848, %v827
    %v850 = vpop.permute.xlu0 %849
    %853 = vset.pattern.permute.xlu0 0
    %854 = vperm.xlu0 %853, %v828
    %v855 = vpop.permute.xlu0 %854
    %858 = vset.pattern.permute.xlu0 0
    %859 = vperm.xlu0 %858, %v829
    %v860 = vpop.permute.xlu0 %859
    %863 = vset.pattern.permute.xlu0 0
    %864 = vperm.xlu0 %863, %v830
    %v865 = vpop.permute.xlu0 %864
    %868 = vset.pattern.permute.xlu0 0
    %869 = vperm.xlu0 %868, %v831
    %v870 = vpop.permute.xlu0 %869
    %873 = vset.pattern.permute.xlu0 0
    %874 = vperm.xlu0 %873, %v832
    %v875 = vpop.permute.xlu0 %874
    %878 = vset.pattern.permute.xlu0 0
    %879 = vperm.xlu0 %878, %v833
    %v880 = vpop.permute.xlu0 %879
    %883 = vset.pattern.permute.xlu0 0
    %884 = vperm.xlu0 %883, %v834
    %v885 = vpop.permute.xlu0 %884
    %888 = vset.pattern.permute.xlu0 0
    %889 = vperm.xlu0 %888, %v835
    %v890 = vpop.permute.xlu0 %889
    %893 = vset.pattern.permute.xlu0 0
    %894 = vperm.xlu0 %893, %v836
    %v895 = vpop.permute.xlu0 %894
    %898 = vset.pattern.permute.xlu0 0
    %899 = vperm.xlu0 %898, %v837
    %v900 = vpop.permute.xlu0 %899
    %903 = vset.pattern.permute.xlu0 0
    %904 = vperm.xlu0 %903, %v838
    %v905 = vpop.permute.xlu0 %904
    %908 = vset.pattern.permute.xlu0 0
    %909 = vperm.xlu0 %908, %v839
    %v910 = vpop.permute.xlu0 %909
    %913 = vset.pattern.permute.xlu0 0
    %914 = vperm.xlu0 %913, %v840
    %v915 = vpop.permute.xlu0 %914
    %918 = vset.pattern.permute.xlu0 0
    %919 = vperm.xlu0 %918, %v841
    %v920 = vpop.permute.xlu0 %919
    %v922 = vadd.f32 %v810, %v845
    %v923 = vadd.f32 %v811, %v850
    %v924 = vadd.f32 %v812, %v855
    %v925 = vadd.f32 %v813, %v860
    %v926 = vadd.f32 %v814, %v865
    %v927 = vadd.f32 %v815, %v870
    %v928 = vadd.f32 %v816, %v875
    %v929 = vadd.f32 %v817, %v880
    %v930 = vadd.f32 %v818, %v885
    %v931 = vadd.f32 %v819, %v890
    %v932 = vadd.f32 %v820, %v895
    %v933 = vadd.f32 %v821, %v900
    %v934 = vadd.f32 %v822, %v905
    %v935 = vadd.f32 %v823, %v910
    %v936 = vadd.f32 %v824, %v915
    %v937 = vadd.f32 %v825, %v920
    %v938 = vld [vmem:[#allocation2] sm:$0x1]
    %v939 = vmax.f32 %v778, %v782
    %v940 = vmax.f32 %v779, %v783
    %v941 = vmax.f32 %v780, %v784
    %v942 = vmax.f32 %v781, %v785
    %v943 = vmax.f32 %v939, %v786
    %v944 = vmax.f32 %v940, %v787
    %v945 = vmax.f32 %v941, %v788
    %v946 = vmax.f32 %v942, %v789
    %v947 = vmax.f32 %v943, %v790
    %v948 = vmax.f32 %v944, %v791
    %v949 = vmax.f32 %v945, %v792
    %v950 = vmax.f32 %v946, %v793
    %v951 = vmax.f32 %v947, %v948
    %v952 = vmax.f32 %v949, %v950
    %v953 = vmax.f32 %v951, %v952
    %v954 = vrot.slane %v953, 4
    %v955 = vmax.f32 %v953, %v954
    %v956 = vrot.slane %v955, 2
    %v957 = vmax.f32 %v955, %v956
    %v958 = vrot.slane %v957, 1
    %v959 = vmax.f32 %v957, %v958
    %v960 = vmax.f32 %v938, %v959
    %961 = vst [vmem:[#allocation2] sm:$0x1] %v960
    %v962 = vld [vmem:[#allocation3] sm:$0x1]
    %v963 = vmin.f32 %v922, %v926
    %v964 = vmin.f32 %v923, %v927
    %v965 = vmin.f32 %v924, %v928
    %v966 = vmin.f32 %v925, %v929
    %v967 = vmin.f32 %v963, %v930
    %v968 = vmin.f32 %v964, %v931
    %v969 = vmin.f32 %v965, %v932
    %v970 = vmin.f32 %v966, %v933
    %v971 = vmin.f32 %v967, %v934
    %v972 = vmin.f32 %v968, %v935
    %v973 = vmin.f32 %v969, %v936
    %v974 = vmin.f32 %v970, %v937
    %v975 = vmin.f32 %v971, %v972
    %v976 = vmin.f32 %v973, %v974
    %v977 = vmin.f32 %v975, %v976
    %v978 = vrot.slane %v977, 4
    %v979 = vmin.f32 %v977, %v978
    %v980 = vrot.slane %v979, 2
    %v981 = vmin.f32 %v979, %v980
    %v982 = vrot.slane %v981, 1
    %v983 = vmin.f32 %v981, %v982
    %v984 = vmin.f32 %v962, %v983
    %985 = vst [vmem:[#allocation3] sm:$0x1] %v984
    // Predicated region
    $region62: #{tpu_custom_call.1} parent=1 // pred_check
      %p986 = pneg %p118
    $region63: #{tpu_custom_call.1} parent=1 // pred_check_branch
      %988 = sbr.rel (%p986) target = $region65
    $region64: #{tpu_custom_call.1} parent=1 // pred_region
      %v989 = vld [vmem:[#allocation2] sm:$0x1]
      %v990 = vld [vmem:[#allocation3] sm:$0x1]
      %v991 = vsub.f32 %v989, %v990
      %v992 = vadd.f32 %v991, 0.1
      %v993 = vmax.f32 %v992, 0.0
      %994 = vst [vmem:[#allocation16] sm:$0x1] %v993
    $region65: #{tpu_custom_call.1} parent=1 // pred_fallthru
      _
    // Predicated region
    $region66: #{tpu_custom_call.1} parent=1 // pred_check
      _
    $region67: #{tpu_custom_call.1} parent=1 // pred_check_branch
      %996 = sbr.rel (0) target = $region69
    $region68: #{tpu_custom_call.1} parent=1 // pred_region
      %s998 = ssub.s32 16, 16
      %999 = vsyncadd [#allocation6], %s998
      %s1001 = sshll.u32 [#allocation16], 4
      %s1002 = int_to_ptr.vmem [resolvable:$true] %s1001
      %1004 = dma.vmem_to_hbm [thread:$0]  %s1002, 16, %s7, [#allocation6]
    $region69: #{tpu_custom_call.1} parent=1 // pred_fallthru
      _
    // Predicated region
    $region70: #{tpu_custom_call.1} parent=1 // pred_check
      _
    $region71: #{tpu_custom_call.1} parent=1 // pred_check_branch
      %1006 = sbr.rel (0) target = $region73
    $region72: #{tpu_custom_call.1} parent=1 // pred_region
      %1007 = dma.done [#allocation6], 16
    $region73: #{tpu_custom_call.1} parent=1 // pred_fallthru
      _
    %1008 = vsyncpa [#allocation5], 1
    %1009 = vsyncpa [#allocation8], 1
    %1010 = vsyncpa [#allocation11], 1
    %1011 = vsyncpa [#allocation14], 1
    %1012 = vsyncpa [#allocation6], 1

</llo_original>
